<compile_context>
chip_gen: v7x
topology: tpu7x:2x2x1
jax: 0.10.0
libtpu: 0.0.40
codegen_flags: <defaults>
</compile_context>

<pallas_src>
import functools

import jax
import jax.numpy as jnp
from jax import lax
from jax.experimental import pallas as pl
from jax.experimental.pallas import tpu as pltpu


def _round_up(x, m):
    return ((x + m - 1) // m) * m


def _gather_rows(idx_sref, table_ref, dst_ref, tile_n):
    """Gather tile_n rows of the VMEM-resident table into dst_ref.

    Row indices come from the SMEM scalar-prefetch buffer; all traffic is
    VMEM->VMEM (the table was DMA'd from HBM once, outside this kernel body).
    """
    base = pl.program_id(0) * tile_n

    @pl.loop(0, tile_n)
    def _(r):
        row = idx_sref[base + r]
        dst_ref[pl.ds(r, 1), :] = table_ref[pl.ds(row, 1), :]


def _row_nll(rows_f32, tgt_col):
    """Per-row cross-entropy NLL: logsumexp(row) - row[target].

    rows_f32: (T, V) f32, tgt_col: (T, 1) i32  ->  (T, 1) f32.
    """
    m = jnp.max(rows_f32, axis=-1, keepdims=True)
    lse = m + jnp.log(jnp.sum(jnp.exp(rows_f32 - m), axis=-1, keepdims=True))
    col = lax.broadcasted_iota(jnp.int32, rows_f32.shape, 1)
    picked = jnp.sum(jnp.where(col == tgt_col, rows_f32, jnp.float32(0.0)),
                     axis=-1, keepdims=True)
    return lse - picked


def _logits_kernel(idx_sref, table_ref, logits_ref, *, tile_n):
    # Inference path: pure tile gather, no EUP/XLU work.
    _gather_rows(idx_sref, table_ref, logits_ref, tile_n)


def _logits_ce_kernel(idx_sref, table_ref, tgt_ref, logits_ref, nll_ref, *, tile_n):
    # Training path: gather the tile (also the logits output), fused CE.
    _gather_rows(idx_sref, table_ref, logits_ref, tile_n)
    rows = logits_ref[...].astype(jnp.float32)          # upcast once for CE math
    nll_ref[...] = _row_nll(rows, tgt_ref[...])


def _ce_only_kernel(idx_sref, table_ref, tgt_ref, nll_ref, rows_scratch, *, tile_n):
    # Loss-only path: gather into VMEM scratch, skip the logits writeback.
    _gather_rows(idx_sref, table_ref, rows_scratch, tile_n)
    rows = rows_scratch[...].astype(jnp.float32)
    nll_ref[...] = _row_nll(rows, tgt_ref[...])


def bigram_forward(idx, table, targets=None, return_logits=True):
    """idx: (B, T) int, table: (V, V) float.  Mirrors BigramLanguageModel.forward.

    return_logits=False additionally enables a loss-only kernel (no logits
    writeback) -- an optimization knob; the default matches PyTorch semantics.
    """
    B, T = idx.shape
    V = table.shape[0]
    N = B * T

    # Batch TILE_N tokens per grid step (multiple of 8 for sublane alignment);
    # cap at 128 so the grid keeps enough steps to shard across TensorCores.
    tile_n = min(128, _round_up(N, 8))
    num_tiles = pl.cdiv(N, tile_n)
    n_pad = num_tiles * tile_n

    idx_flat = idx.reshape(N).astype(jnp.int32)
    if n_pad != N:
        idx_flat = jnp.pad(idx_flat, (0, n_pad - N))

    out_dtype = table.dtype   # keep native dtype for gather / logits storage

    # Explicit VMEM budget: resident table + double-buffered tiles + headroom.
    itemsize = table.dtype.itemsize
    table_bytes = V * V * itemsize
    tile_bytes = tile_n * V * itemsize
    vmem_need = 2 * table_bytes + 4 * tile_bytes + 16 * tile_n * 4 + (1 << 20)
    if vmem_need > (48 << 20):
        # TODO(synk): fall back to the HBM manual-gather path for huge vocabs.
        raise NotImplementedError("vocab too large for the VMEM-resident table path")
    cparams = pltpu.CompilerParams(
        dimension_semantics=("parallel",),
        vmem_limit_bytes=int(min(64 << 20, max(vmem_need, 8 << 20))),
    )

    # Table: constant index_map -> DMA'd once, stays VMEM-resident.
    table_spec = pl.BlockSpec((V, V), lambda t, idx_ref: (0, 0))
    logits_spec = pl.BlockSpec((tile_n, V), lambda t, idx_ref: (t, 0))
    col_spec = pl.BlockSpec((tile_n, 1), lambda t, idx_ref: (t, 0))

    if targets is None:
        logits_p = pl.pallas_call(
            functools.partial(_logits_kernel, tile_n=tile_n),
            out_shape=jax.ShapeDtypeStruct((n_pad, V), out_dtype),
            grid_spec=pltpu.PrefetchScalarGridSpec(
                num_scalar_prefetch=1,
                grid=(num_tiles,),
                in_specs=[table_spec],
                out_specs=logits_spec,
            ),
            compiler_params=cparams,
        )(idx_flat, table)
        # matches PyTorch: logits stays (B, T, C), loss is None
        return logits_p[:N].reshape(B, T, V), None

    tgt_col = targets.reshape(N, 1).astype(jnp.int32)
    if n_pad != N:
        tgt_col = jnp.pad(tgt_col, ((0, n_pad - N), (0, 0)))

    if return_logits:
        logits_p, nll = pl.pallas_call(
            functools.partial(_logits_ce_kernel, tile_n=tile_n),
            out_shape=(jax.ShapeDtypeStruct((n_pad, V), out_dtype),
                       jax.ShapeDtypeStruct((n_pad, 1), jnp.float32)),
            grid_spec=pltpu.PrefetchScalarGridSpec(
                num_scalar_prefetch=1,
                grid=(num_tiles,),
                in_specs=[table_spec, col_spec],
                out_specs=(logits_spec, col_spec),
            ),
            compiler_params=cparams,
        )(idx_flat, table, tgt_col)
        # mean reduction over the B*T valid rows (F.cross_entropy default),
        # done in JAX from the per-row partials so the grid axis stays parallel.
        loss = jnp.sum(nll[:N]) / jnp.float32(N)
        # matches PyTorch: logits was view()'d to (B*T, C) before the loss
        return logits_p[:N], loss

    # Loss-only variant: skips the (N, V) logits writeback (~2x less HBM traffic).
    nll = pl.pallas_call(
        functools.partial(_ce_only_kernel, tile_n=tile_n),
        out_shape=jax.ShapeDtypeStruct((n_pad, 1), jnp.float32),
        grid_spec=pltpu.PrefetchScalarGridSpec(
            num_scalar_prefetch=1,
            grid=(num_tiles,),
            in_specs=[table_spec, col_spec],
            out_specs=col_spec,
            scratch_shapes=[pltpu.VMEM((tile_n, V), out_dtype)],
        ),
        compiler_params=cparams,
    )(idx_flat, table, tgt_col)
    loss = jnp.sum(nll[:N]) / jnp.float32(N)
    return None, loss


if __name__ == "__main__":
    # Build a tiny "dataset" in-script, exactly like bigram.py derives vocab.
    text = "hello world! this is a tiny bigram language model demo."
    chars = sorted(list(set(text)))
    vocab_size = len(chars)

    key = jax.random.PRNGKey(0)
    k_tab, k_idx, k_tgt = jax.random.split(key, 3)

    # nn.Embedding default init: N(0, 1)
    table = jax.random.normal(k_tab, (vocab_size, vocab_size), dtype=jnp.float32)

    B, T = 2, 8
    idx = jax.random.randint(k_idx, (B, T), 0, vocab_size, dtype=jnp.int32)
    targets = jax.random.randint(k_tgt, (B, T), 0, vocab_size, dtype=jnp.int32)

    # --- Pallas kernels ------------------------------------------------------
    logits, loss = bigram_forward(idx, table, targets)
    none_logits, loss_only = bigram_forward(idx, table, targets, return_logits=False)
    logits_nt, loss_nt = bigram_forward(idx, table, None)
    jax.block_until_ready((logits, loss, loss_only, logits_nt))

    # --- pure-JAX reference check -------------------------------------------
    ref_logits = table[idx.reshape(-1)]                      # (B*T, V)
    ref_lse = jax.scipy.special.logsumexp(ref_logits, axis=-1)
    ref_nll = ref_lse - ref_logits[jnp.arange(B * T), targets.reshape(-1)]
    ref_loss = jnp.mean(ref_nll)

    assert logits.shape == (B * T, vocab_size)
    assert logits_nt.shape == (B, T, vocab_size)
    assert loss_nt is None
    assert none_logits is None
    assert jnp.allclose(logits, ref_logits, atol=1e-5, rtol=1e-5)
    assert jnp.allclose(logits_nt, ref_logits.reshape(B, T, vocab_size),
                        atol=1e-5, rtol=1e-5)
    assert jnp.allclose(loss, ref_loss, atol=1e-5, rtol=1e-5)
    assert jnp.allclose(loss_only, ref_loss, atol=1e-5, rtol=1e-5)

    print("KERNEL_OK")
</pallas_src>

<mosaic_0001>
module attributes {stable_mosaic.version = 11 : i64} {
  func.func @_logits_ce_kernel(%arg0: i32, %arg1: memref<16xi32, #tpu.memory_space<smem>>, %arg2: memref<20x20xf32, #tpu.memory_space<vmem>>, %arg3: memref<16x1xi32, #tpu.memory_space<vmem>>, %arg4: memref<16x20xf32, #tpu.memory_space<vmem>>, %arg5: memref<16x1xf32, #tpu.memory_space<vmem>>) attributes {dimension_semantics = [#tpu.dimension_semantics<parallel>], iteration_bounds = array<i64: 1>, scalar_prefetch = 1 : i64, scratch_operands = 0 : i64, tpu.core_type = #tpu.core_type<tc>, window_params = [{pipeline_mode = #tpu.pipeline_mode<synchronous>, transform_indices = @transform_0, window_bounds = array<i64: 20, 20>}, {transform_indices = @transform_1, window_bounds = array<i64: 16, 1>}, {transform_indices = @transform_2, window_bounds = array<i64: 16, 20>}, {transform_indices = @transform_3, window_bounds = array<i64: 16, 1>}]} {
    %c16_i32 = arith.constant 16 : i32
    %0 = arith.muli %arg0, %c16_i32 : i32
    %c0_i32 = arith.constant 0 : i32
    %c16_i32_0 = arith.constant 16 : i32
    %1 = arith.addi %c0_i32, %c16_i32_0 : i32
    %c1_i32 = arith.constant 1 : i32
    scf.for %arg6 = %c0_i32 to %1 step %c1_i32  : i32 {
      %c1_i32_10 = arith.constant 1 : i32
      %22 = arith.muli %arg6, %c1_i32_10 : i32
      %c0_i32_11 = arith.constant 0 : i32
      %23 = arith.addi %c0_i32_11, %22 : i32
      %24 = arith.addi %0, %23 : i32
      %25 = arith.index_cast %24 : i32 to index
      %26 = memref.load %arg1[%25] : memref<16xi32, #tpu.memory_space<smem>>
      %27 = arith.index_cast %26 : i32 to index
      %c0_12 = arith.constant 0 : index
      %28 = vector.load %arg2[%27, %c0_12] : memref<20x20xf32, #tpu.memory_space<vmem>>, vector<1x20xf32>
      %29 = arith.index_cast %23 : i32 to index
      %c0_13 = arith.constant 0 : index
      %30 = vector.load %arg4[%29, %c0_13] : memref<16x20xf32, #tpu.memory_space<vmem>>, vector<1x20xf32>
      tpu.vector_store %arg4[%29, %c0_13], %28 {strides = array<i32>} : memref<16x20xf32, #tpu.memory_space<vmem>>, vector<1x20xf32>,
    }
    %c16_i32_1 = arith.constant 16 : i32
    %c0 = arith.constant 0 : index
    %c0_2 = arith.constant 0 : index
    %2 = vector.load %arg4[%c0, %c0_2] : memref<16x20xf32, #tpu.memory_space<vmem>>, vector<16x20xf32>
    %c0_3 = arith.constant 0 : index
    %c0_4 = arith.constant 0 : index
    %3 = vector.load %arg3[%c0_3, %c0_4] : memref<16x1xi32, #tpu.memory_space<vmem>>, vector<16x1xi32>
    %cst = arith.constant dense<0xFF800000> : vector<16xf32>
    %4 = vector.multi_reduction <maximumf>, %2, %cst [1] : vector<16x20xf32> to vector<16xf32>
    %5 = vector.shape_cast %4 : vector<16xf32> to vector<16x1xf32>
    %6 = vector.broadcast %5 : vector<16x1xf32> to vector<16x20xf32>
    %7 = arith.subf %2, %6 : vector<16x20xf32>
    %8 = math.exp %7 : vector<16x20xf32>
    %cst_5 = arith.constant dense<0.000000e+00> : vector<16xf32>
    %9 = vector.multi_reduction <add>, %8, %cst_5 [1] : vector<16x20xf32> to vector<16xf32>
    %10 = vector.shape_cast %9 : vector<16xf32> to vector<16x1xf32>
    %11 = math.log %10 : vector<16x1xf32>
    %12 = arith.addf %5, %11 : vector<16x1xf32>
    %13 = tpu.iota {dimensions = array<i32: 1>} : vector<16x20xi32>
    %14 = vector.broadcast %3 : vector<16x1xi32> to vector<16x20xi32>
    %15 = arith.cmpi eq, %13, %14 : vector<16x20xi32>
    %cst_6 = arith.constant 0.000000e+00 : f32
    %16 = vector.broadcast %cst_6 : f32 to vector<16x20xf32>
    %17 = arith.select %15, %2, %16 : vector<16x20xi1>, vector<16x20xf32>
    %cst_7 = arith.constant dense<0.000000e+00> : vector<16xf32>
    %18 = vector.multi_reduction <add>, %17, %cst_7 [1] : vector<16x20xf32> to vector<16xf32>
    %19 = vector.shape_cast %18 : vector<16xf32> to vector<16x1xf32>
    %20 = arith.subf %12, %19 : vector<16x1xf32>
    %c0_8 = arith.constant 0 : index
    %c0_9 = arith.constant 0 : index
    %21 = vector.load %arg5[%c0_8, %c0_9] : memref<16x1xf32, #tpu.memory_space<vmem>>, vector<16x1xf32>
    tpu.vector_store %arg5[%c0_8, %c0_9], %20 {strides = array<i32>} : memref<16x1xf32, #tpu.memory_space<vmem>>, vector<16x1xf32>,
    return
  }
  func.func @transform_0(%arg0: i32, %arg1: memref<16xi32, #tpu.memory_space<smem>>) -> (i32, i32) {
    %c0_i32 = arith.constant 0 : i32
    %c0_i32_0 = arith.constant 0 : i32
    %c0_i32_1 = arith.constant 0 : i32
    return %c0_i32, %c0_i32_0 : i32, i32
  }
  func.func @transform_1(%arg0: i32, %arg1: memref<16xi32, #tpu.memory_space<smem>>) -> (i32, i32) {
    %c0_i32 = arith.constant 0 : i32
    %c0_i32_0 = arith.constant 0 : i32
    return %arg0, %c0_i32 : i32, i32
  }
  func.func @transform_2(%arg0: i32, %arg1: memref<16xi32, #tpu.memory_space<smem>>) -> (i32, i32) {
    %c0_i32 = arith.constant 0 : i32
    %c0_i32_0 = arith.constant 0 : i32
    return %arg0, %c0_i32 : i32, i32
  }
  func.func @transform_3(%arg0: i32, %arg1: memref<16xi32, #tpu.memory_space<smem>>) -> (i32, i32) {
    %c0_i32 = arith.constant 0 : i32
    %c0_i32_0 = arith.constant 0 : i32
    return %arg0, %c0_i32 : i32, i32
  }
}

</mosaic_0001>

<llo_original>
// kernel: tpu_custom_call.1
$region0: #{tpu_custom_call.1}
  #allocation0 [shape = 'u32[]', space=smem, size = 0x4, offset = 0x4, fixed_abs, tag = 'smem constant byte address 0x4 - core index']
  #allocation1 [shape = 'u32[144,128]{1,0:T(1,128)}', space=vmem, size = 0x12000, scoped, tag = 'internal scratch']
  #allocation2 [shape = 's32[1]{0}', space=sflag, size = 0x4, scoped, tag = 'scoped memory for tpu_custom_call.1']
  #allocation3 [shape = 'u8[512]{0}', space=smem, size = 0x200, scoped, tag = 'prefetched SMEM operand 0']
  %s0 = inlined_call_operand.vmem [shape: s32[16], index: 0, kind: input, shape index: {}]
  %s1 = inlined_call_operand.hbm [shape: f32[20,20], index: 1, kind: input, shape index: {}]
  %s2 = inlined_call_operand.vmem [shape: s32[16,1], index: 2, kind: input, shape index: {}]
  %s3 = inlined_call_operand.hbm [shape: f32[16,20], index: 3, kind: output, shape index: {0}]
  %s4 = inlined_call_operand.vmem [shape: f32[16,1], index: 4, kind: output, shape index: {1}]
  %5 = xla_tuple %s3, %s4
  %s6 = sld [smem:[#allocation0]]
  $region37: #{tpu_custom_call.1} parent=0
    _
  %s8 = ssub.s32 1, %s6
  %s9 = scalar_select 0, %s8, %s6
  %s10 = sshll.u32 %s0, 4
  %s11 = int_to_ptr.vmem [resolvable:$true] %s10
  %13 = dma.vmem_to_smem %s11, 16, [#allocation3], [#allocation2]
  %14 = dma.done [#allocation2], 16
  %15 = sfence
  $region1: #{tpu_custom_call.1} parent=0
    #allocation4 [shape = 'u8[12288]{0}', space=vmem, size = 0x3000, scoped, tag = 'input window, operand 1, single buffered']
    #allocation5 [shape = 's32[1]{0}', space=sflag, size = 0x4, scoped, tag = 'scoped memory for tpu_custom_call.1']
    #allocation6 [shape = 's32[1]{0}', space=sflag, size = 0x4, scoped, tag = 'scoped memory for tpu_custom_call.1']
    #allocation7 [shape = 'u8[8192]{0}', space=vmem, size = 0x2000, scoped, tag = 'output window, operand 0, single buffered']
    %16 = vsyncpa [#allocation5], 0
    %17 = vsyncpa [#allocation6], 0
    // Predicated region
    $region2: #{tpu_custom_call.1} parent=1 // pred_check
      _
    $region3: #{tpu_custom_call.1} parent=1 // pred_check_branch
      %19 = sbr.rel (0) target = $region5
    $region4: #{tpu_custom_call.1} parent=1 // pred_region
      %s21 = ssub.s32 384, 384
      %22 = vsyncadd [#allocation5], %s21
      %s23 = sshll.u32 [#allocation4], 4
      %s24 = int_to_ptr.vmem [resolvable:$true] %s23
      %29 = dma.hbm_to_vmem [thread:$0]  %s1, 384, %s24, [#allocation5], 128, 128, 8
    $region5: #{tpu_custom_call.1} parent=1 // pred_fallthru
      _
    // Predicated region
    $region6: #{tpu_custom_call.1} parent=1 // pred_check
      _
    $region7: #{tpu_custom_call.1} parent=1 // pred_check_branch
      %31 = sbr.rel (0) target = $region9
    $region8: #{tpu_custom_call.1} parent=1 // pred_region
      _
    $region9: #{tpu_custom_call.1} parent=1 // pred_fallthru
      _
    // Predicated region
    $region10: #{tpu_custom_call.1} parent=1 // pred_check
      _
    $region11: #{tpu_custom_call.1} parent=1 // pred_check_branch
      %33 = sbr.rel (0) target = $region13
    $region12: #{tpu_custom_call.1} parent=1 // pred_region
      %34 = dma.done [#allocation5], 384
    $region13: #{tpu_custom_call.1} parent=1 // pred_fallthru
      _
    %s35 = smul.u32 0, 16
    loop: start=0, step=1, limit=16
    $region14: #{tpu_custom_call.1} parent=1 // loop_pre_header
      _
    $region15: #{tpu_custom_call.1} parent=1 // loop_header
      %s37 = sphi 0, %s41
      %p38 = scmp.ge.s32.totalorder %s37, 16
    $region16: #{tpu_custom_call.1} parent=1 // loop_header_branch
      %40 = sbr.rel (%p38) target = $region20
    $region17: #{tpu_custom_call.1} parent=1 // loop_body
      %s42 = sadd.s32 %s35, %s37
      %s43 = sld [smem:[#allocation3 + %s42]]
      %s44 = scalar_lea.vmem [#allocation4], %s43
      %v45 = vld [vmem:[%s44] sm:$0x1]
      %s46 = scalar_lea.vmem [#allocation7], %s37
      %vm47 = vcmask 155648
      %48 = vst.msk [vmem:[%s46] sm:$0x1] %vm47, %v45
    $region18: #{tpu_custom_call.1} parent=1 // loop_footer
      %s41 = sadd.s32 1, %s37
    $region19: #{tpu_custom_call.1} parent=1 // loop_footer_branch
      %36 = sbr.rel target = $region15
    $region20: #{tpu_custom_call.1} parent=1 // loop_exit
      _
    %v49 = vld [vmem:[#allocation7] sm:$0xff]
    %v50 = vld [vmem:[#allocation7 + $0x8] sm:$0xff]
    %v51 = vld [vmem:[%s2] sm:$0xff]
    %v52 = vld [vmem:[%s2 + $0x8] sm:$0xff]
    %vm53 = vcmask 162816
    %v54 = vsel %vm53, %v49, -inf
    %55 = vmax.xlane.f32.xlu0 %v54
    %v56 = vpop.xlane.xlu0 %55
    %v57 = vsel %vm53, %v50, -inf
    %58 = vmax.xlane.f32.xlu0 %v57
    %v59 = vpop.xlane.xlu0 %58
    %v60 = vsub.f32 %v49, %v56
    %v61 = vsub.f32 %v50, %v59
    %v62 = vmul.f32 %v60, 1.442695
    %v63 = vpow.pop %v62
    %v64 = vmul.f32 %v61, 1.442695
    %v65 = vpow.pop %v64
    %v66 = vsel %vm53, %v63, 0.0
    %67 = vadd.xlane.f32.xlu0 %v66
    %v68 = vpop.xlane.xlu0 %67
    %v69 = vsel %vm53, %v65, 0.0
    %70 = vadd.xlane.f32.xlu0 %v69
    %v71 = vpop.xlane.xlu0 %70
    %v72 = vlog2.pop %v68
    %v73 = vmul.f32 %v72, 0.6931472
    %v74 = vlog2.pop %v71
    %v75 = vmul.f32 %v74, 0.6931472
    %v76 = vadd.f32 %v56, %v73
    %v77 = vadd.f32 %v59, %v75
    %v78 = vlaneseq
    %v79 = vand.u32 %v78, 127
    %80 = vset.pattern.permute.xlu0 0
    %81 = vperm.xlu0 %80, %v51
    %v82 = vpop.permute.xlu0 %81
    %83 = vset.pattern.permute.xlu0 0
    %84 = vperm.xlu0 %83, %v52
    %v85 = vpop.permute.xlu0 %84
    %vm86 = vcmp.eq.s32.totalorder %v79, %v82
    %vm87 = vcmp.eq.s32.totalorder %v79, %v85
    %v88 = vsel %vm86, %v49, 0.0
    %v89 = vsel %vm87, %v50, 0.0
    %v90 = vsel %vm53, %v88, 0.0
    %91 = vadd.xlane.f32.xlu0 %v90
    %v92 = vpop.xlane.xlu0 %91
    %v93 = vsel %vm53, %v89, 0.0
    %94 = vadd.xlane.f32.xlu0 %v93
    %v95 = vpop.xlane.xlu0 %94
    %v96 = vsub.f32 %v76, %v92
    %v97 = vsub.f32 %v77, %v95
    %vm98 = vcmask 7168
    %99 = vst.msk [vmem:[%s4] sm:$0xff] %vm98, %v96
    %100 = vst.msk [vmem:[%s4 + $0x8] sm:$0xff] %vm98, %v97
    // Predicated region
    $region21: #{tpu_custom_call.1} parent=1 // pred_check
      _
    $region22: #{tpu_custom_call.1} parent=1 // pred_check_branch
      %102 = sbr.rel (0) target = $region24
    $region23: #{tpu_custom_call.1} parent=1 // pred_region
      %s104 = ssub.s32 256, 256
      %105 = vsyncadd [#allocation6], %s104
      %s106 = sshll.u32 [#allocation7], 4
      %s107 = int_to_ptr.vmem [resolvable:$true] %s106
      %112 = dma.vmem_to_hbm [thread:$0]  %s107, 256, %s3, [#allocation6], 128, 128, 8
    $region24: #{tpu_custom_call.1} parent=1 // pred_fallthru
      _
    // Predicated region
    $region25: #{tpu_custom_call.1} parent=1 // pred_check
      _
    $region26: #{tpu_custom_call.1} parent=1 // pred_check_branch
      %114 = sbr.rel (0) target = $region28
    $region27: #{tpu_custom_call.1} parent=1 // pred_region
      _
    $region28: #{tpu_custom_call.1} parent=1 // pred_fallthru
      _
    // Predicated region
    $region29: #{tpu_custom_call.1} parent=1 // pred_check
      _
    $region30: #{tpu_custom_call.1} parent=1 // pred_check_branch
      %116 = sbr.rel (0) target = $region32
    $region31: #{tpu_custom_call.1} parent=1 // pred_region
      %117 = dma.done [#allocation6], 256
    $region32: #{tpu_custom_call.1} parent=1 // pred_fallthru
      _
    // Predicated region
    $region33: #{tpu_custom_call.1} parent=1 // pred_check
      _
    $region34: #{tpu_custom_call.1} parent=1 // pred_check_branch
      %119 = sbr.rel (0) target = $region36
    $region35: #{tpu_custom_call.1} parent=1 // pred_region
      _
    $region36: #{tpu_custom_call.1} parent=1 // pred_fallthru
      _
    %120 = vsyncpa [#allocation5], 1
    %121 = vsyncpa [#allocation6], 1

</llo_original>
